<compile_context>
chip_gen: v7x
topology: tpu7x:2x2x1
jax: 0.10.0
libtpu: 0.0.40
codegen_flags: <defaults>
</compile_context>

<pallas_src>
import functools

import jax
import jax.numpy as jnp
from jax.experimental import pallas as pl
from jax.experimental.pallas import tpu as pltpu


def _round_up(x, m):
    return ((x + m - 1) // m) * m


def _mlp_kernel(*refs, num_layers):
    """Fused MLP forward on one batch tile.

    refs = (x_ref, w0_ref, b0_ref, w1_ref, b1_ref, ..., o_ref)
    x/W are bf16 (MXU-native), biases f32.  Matmuls accumulate in f32; the
    bias-add + ReLU epilogue stays f32 and only the operand fed to the next
    matmul is downcast to bf16.
    """
    x_ref = refs[0]
    o_ref = refs[-1]
    wb_refs = refs[1:-1]

    h = x_ref[...]  # bf16
    for i in range(num_layers):
        w = wb_refs[2 * i][...]        # bf16
        b = wb_refs[2 * i + 1][...]    # f32
        acc = jnp.dot(h, w, preferred_element_type=jnp.float32) + b
        if i < num_layers - 1:
            acc = jnp.maximum(acc, 0.0)      # activation_fn = ReLU (f32 epilogue)
            # Dropout(p=0.0) / eval-mode dropout is the identity.
            h = acc.astype(jnp.bfloat16)     # downcast only for the next MXU op
        else:
            o_ref[...] = acc.astype(o_ref.dtype)


def custom_net_forward(x, params, *, batch_tile=None):
    """Run the fused CustomNet forward pass with a single pallas_call.

    x      : (B, layer_sizes[0]) float32
    params : list of (W, b) with W: (d_in, d_out) f32, b: (1, d_out) f32
    returns (B, layer_sizes[-1]) float32
    """
    num_layers = len(params)
    B, d_in = x.shape
    d_out = params[-1][0].shape[1]

    # ---- batch tiling: prefer 256-row tiles (good DMA/MXU occupancy, many grid
    # steps for pipelining + v7x megacore sharding), multiple of 8 sublanes. ----
    if batch_tile is None:
        tb = min(256, _round_up(B, 8))
    else:
        tb = batch_tile
    tb = max(8, (tb // 8) * 8)

    B_pad = _round_up(B, tb)
    if B_pad != B:
        x = jnp.pad(x, ((0, B_pad - B), (0, 0)))
    grid = (B_pad // tb,)

    # ---- dtype prep: bf16 activations/weights for the MXU, f32 biases. ----
    x_bf16 = x.astype(jnp.bfloat16)

    # ---- lane-dense output: pad last layer's output columns to a multiple of 128
    # so stores are full-lane (no vst.msk); slice back outside the kernel. ----
    d_out_pad = _round_up(d_out, 128)
    w_last, b_last = params[-1]
    if d_out_pad != d_out:
        w_last = jnp.pad(w_last, ((0, 0), (0, d_out_pad - d_out)))
        b_last = jnp.pad(b_last, ((0, 0), (0, d_out_pad - d_out)))
    prepped = [(w.astype(jnp.bfloat16), b.astype(jnp.float32)) for (w, b) in params[:-1]]
    prepped.append((w_last.astype(jnp.bfloat16), b_last.astype(jnp.float32)))

    # ---- specs: batch-tiled x/out stream; tiny weights are grid-invariant
    # (constant block index -> fetched once by the pipeline). ----
    in_specs = [pl.BlockSpec((tb, d_in), lambda i: (i, 0))]
    flat_args = [x_bf16]
    for (w, b) in prepped:
        in_specs.append(pl.BlockSpec(w.shape, lambda i: (0, 0)))
        in_specs.append(pl.BlockSpec(b.shape, lambda i: (0, 0)))
        flat_args.append(w)
        flat_args.append(b)

    out_specs = pl.BlockSpec((tb, d_out_pad), lambda i: (i, 0))

    kernel = functools.partial(_mlp_kernel, num_layers=num_layers)

    out_padded = pl.pallas_call(
        kernel,
        out_shape=jax.ShapeDtypeStruct((B_pad, d_out_pad), jnp.float32),
        grid=grid,
        in_specs=in_specs,
        out_specs=out_specs,
        compiler_params=pltpu.CompilerParams(
            dimension_semantics=("parallel",),
        ),
    )(*flat_args)

    return out_padded[:B, :d_out]


def init_params(key, layer_sizes):
    """Deterministic PyTorch-Linear-style init: U(-1/sqrt(fan_in), 1/sqrt(fan_in))."""
    params = []
    keys = jax.random.split(key, len(layer_sizes) - 1)
    for k, d_in, d_out in zip(keys, layer_sizes[:-1], layer_sizes[1:]):
        kw, kb = jax.random.split(k)
        bound = 1.0 / float(jnp.sqrt(jnp.float32(d_in)))
        w = jax.random.uniform(kw, (d_in, d_out), jnp.float32, -bound, bound)
        b = jax.random.uniform(kb, (1, d_out), jnp.float32, -bound, bound)
        params.append((w, b))
    return params


def _reference_forward(x, params):
    """JAX reference with the same bf16-operand / f32-accumulate dtype flow."""
    h = x.astype(jnp.bfloat16)
    for i, (w, b) in enumerate(params):
        acc = jnp.dot(h, w.astype(jnp.bfloat16),
                      preferred_element_type=jnp.float32) + b
        if i < len(params) - 1:
            acc = jnp.maximum(acc, 0.0)
            h = acc.astype(jnp.bfloat16)
        else:
            h = acc
    return h


if __name__ == "__main__":
    key = jax.random.PRNGKey(0)
    k_x, k_p = jax.random.split(key)

    # layer_sizes = [32, 64, 48, 16]; dropoff = 0.0 (identity).
    # batch = 1024 -> 4 grid steps of 256-row tiles (pipelined, megacore-shardable).
    layer_sizes = [32, 64, 48, 16]
    batch = 1024

    x = jax.random.normal(k_x, (batch, layer_sizes[0]), dtype=jnp.float32)
    params = init_params(k_p, layer_sizes)

    out = custom_net_forward(x, params)
    out = jax.block_until_ready(out)

    ref = _reference_forward(x, params)
    assert out.shape == (batch, layer_sizes[-1])
    assert out.dtype == jnp.float32
    assert jnp.allclose(out, ref, atol=1e-2, rtol=1e-2), "mismatch vs. JAX reference"

    # also sanity-check a ragged, small batch (padding path)
    x_small = x[:37]
    out_small = jax.block_until_ready(custom_net_forward(x_small, params))
    assert out_small.shape == (37, layer_sizes[-1])
    assert jnp.allclose(out_small, ref[:37], atol=1e-2, rtol=1e-2)

    print("KERNEL_OK")
</pallas_src>

<mosaic_0001>
module attributes {stable_mosaic.version = 11 : i64} {
  func.func @_mlp_kernel(%arg0: i32, %arg1: memref<256x32xbf16, #tpu.memory_space<vmem>>, %arg2: memref<32x64xbf16, #tpu.memory_space<vmem>>, %arg3: memref<1x64xf32, #tpu.memory_space<vmem>>, %arg4: memref<64x48xbf16, #tpu.memory_space<vmem>>, %arg5: memref<1x48xf32, #tpu.memory_space<vmem>>, %arg6: memref<48x128xbf16, #tpu.memory_space<vmem>>, %arg7: memref<1x128xf32, #tpu.memory_space<vmem>>, %arg8: memref<256x128xf32, #tpu.memory_space<vmem>>) attributes {dimension_semantics = [#tpu.dimension_semantics<parallel>], iteration_bounds = array<i64: 4>, scalar_prefetch = 0 : i64, scratch_operands = 0 : i64, tpu.core_type = #tpu.core_type<tc>, window_params = [{transform_indices = @transform_0, window_bounds = array<i64: 256, 32>}, {pipeline_mode = #tpu.pipeline_mode<synchronous>, transform_indices = @transform_1, window_bounds = array<i64: 32, 64>}, {pipeline_mode = #tpu.pipeline_mode<synchronous>, transform_indices = @transform_2, window_bounds = array<i64: 1, 64>}, {pipeline_mode = #tpu.pipeline_mode<synchronous>, transform_indices = @transform_3, window_bounds = array<i64: 64, 48>}, {pipeline_mode = #tpu.pipeline_mode<synchronous>, transform_indices = @transform_4, window_bounds = array<i64: 1, 48>}, {pipeline_mode = #tpu.pipeline_mode<synchronous>, transform_indices = @transform_5, window_bounds = array<i64: 48, 128>}, {pipeline_mode = #tpu.pipeline_mode<synchronous>, transform_indices = @transform_6, window_bounds = array<i64: 1, 128>}, {transform_indices = @transform_7, window_bounds = array<i64: 256, 128>}]} {
    %c0 = arith.constant 0 : index
    %c0_0 = arith.constant 0 : index
    %0 = vector.load %arg1[%c0, %c0_0] : memref<256x32xbf16, #tpu.memory_space<vmem>>, vector<256x32xbf16>
    %c0_1 = arith.constant 0 : index
    %c0_2 = arith.constant 0 : index
    %1 = vector.load %arg2[%c0_1, %c0_2] : memref<32x64xbf16, #tpu.memory_space<vmem>>, vector<32x64xbf16>
    %c0_3 = arith.constant 0 : index
    %c0_4 = arith.constant 0 : index
    %2 = vector.load %arg3[%c0_3, %c0_4] : memref<1x64xf32, #tpu.memory_space<vmem>>, vector<1x64xf32>
    %cst = arith.constant dense<0.000000e+00> : vector<256x64xf32>
    %3 = tpu.matmul %0, %1, %cst {dimension_numbers = #tpu.dot_dimension_numbers<[1], [0], [0], [1], [0, 0, 1, 1], [], []>} : vector<256x32xbf16>, vector<32x64xbf16>, vector<256x64xf32> -> vector<256x64xf32>
    %4 = vector.broadcast %2 : vector<1x64xf32> to vector<256x64xf32>
    %5 = arith.addf %3, %4 : vector<256x64xf32>
    %cst_5 = arith.constant 0.000000e+00 : f32
    %6 = vector.broadcast %cst_5 : f32 to vector<256x64xf32>
    %7 = arith.maximumf %5, %6 : vector<256x64xf32>
    %8 = arith.truncf %7 : vector<256x64xf32> to vector<256x64xbf16>
    %c0_6 = arith.constant 0 : index
    %c0_7 = arith.constant 0 : index
    %9 = vector.load %arg4[%c0_6, %c0_7] : memref<64x48xbf16, #tpu.memory_space<vmem>>, vector<64x48xbf16>
    %c0_8 = arith.constant 0 : index
    %c0_9 = arith.constant 0 : index
    %10 = vector.load %arg5[%c0_8, %c0_9] : memref<1x48xf32, #tpu.memory_space<vmem>>, vector<1x48xf32>
    %cst_10 = arith.constant dense<0.000000e+00> : vector<256x48xf32>
    %11 = tpu.matmul %8, %9, %cst_10 {dimension_numbers = #tpu.dot_dimension_numbers<[1], [0], [0], [1], [0, 0, 1, 1], [], []>} : vector<256x64xbf16>, vector<64x48xbf16>, vector<256x48xf32> -> vector<256x48xf32>
    %12 = vector.broadcast %10 : vector<1x48xf32> to vector<256x48xf32>
    %13 = arith.addf %11, %12 : vector<256x48xf32>
    %cst_11 = arith.constant 0.000000e+00 : f32
    %14 = vector.broadcast %cst_11 : f32 to vector<256x48xf32>
    %15 = arith.maximumf %13, %14 : vector<256x48xf32>
    %16 = arith.truncf %15 : vector<256x48xf32> to vector<256x48xbf16>
    %c0_12 = arith.constant 0 : index
    %c0_13 = arith.constant 0 : index
    %17 = vector.load %arg6[%c0_12, %c0_13] : memref<48x128xbf16, #tpu.memory_space<vmem>>, vector<48x128xbf16>
    %c0_14 = arith.constant 0 : index
    %c0_15 = arith.constant 0 : index
    %18 = vector.load %arg7[%c0_14, %c0_15] : memref<1x128xf32, #tpu.memory_space<vmem>>, vector<1x128xf32>
    %cst_16 = arith.constant dense<0.000000e+00> : vector<256x128xf32>
    %19 = tpu.matmul %16, %17, %cst_16 {dimension_numbers = #tpu.dot_dimension_numbers<[1], [0], [0], [1], [0, 0, 1, 1], [], []>} : vector<256x48xbf16>, vector<48x128xbf16>, vector<256x128xf32> -> vector<256x128xf32>
    %20 = vector.broadcast %18 : vector<1x128xf32> to vector<256x128xf32>
    %21 = arith.addf %19, %20 : vector<256x128xf32>
    %c0_17 = arith.constant 0 : index
    %c0_18 = arith.constant 0 : index
    %22 = vector.load %arg8[%c0_17, %c0_18] : memref<256x128xf32, #tpu.memory_space<vmem>>, vector<256x128xf32>
    tpu.vector_store %arg8[%c0_17, %c0_18], %21 {strides = array<i32>} : memref<256x128xf32, #tpu.memory_space<vmem>>, vector<256x128xf32>,
    return
  }
  func.func @transform_0(%arg0: i32) -> (i32, i32) {
    %c0_i32 = arith.constant 0 : i32
    %c0_i32_0 = arith.constant 0 : i32
    return %arg0, %c0_i32 : i32, i32
  }
  func.func @transform_1(%arg0: i32) -> (i32, i32) {
    %c0_i32 = arith.constant 0 : i32
    %c0_i32_0 = arith.constant 0 : i32
    %c0_i32_1 = arith.constant 0 : i32
    return %c0_i32, %c0_i32_0 : i32, i32
  }
  func.func @transform_2(%arg0: i32) -> (i32, i32) {
    %c0_i32 = arith.constant 0 : i32
    %c0_i32_0 = arith.constant 0 : i32
    %c0_i32_1 = arith.constant 0 : i32
    return %c0_i32, %c0_i32_0 : i32, i32
  }
  func.func @transform_3(%arg0: i32) -> (i32, i32) {
    %c0_i32 = arith.constant 0 : i32
    %c0_i32_0 = arith.constant 0 : i32
    %c0_i32_1 = arith.constant 0 : i32
    return %c0_i32, %c0_i32_0 : i32, i32
  }
  func.func @transform_4(%arg0: i32) -> (i32, i32) {
    %c0_i32 = arith.constant 0 : i32
    %c0_i32_0 = arith.constant 0 : i32
    %c0_i32_1 = arith.constant 0 : i32
    return %c0_i32, %c0_i32_0 : i32, i32
  }
  func.func @transform_5(%arg0: i32) -> (i32, i32) {
    %c0_i32 = arith.constant 0 : i32
    %c0_i32_0 = arith.constant 0 : i32
    %c0_i32_1 = arith.constant 0 : i32
    return %c0_i32, %c0_i32_0 : i32, i32
  }
  func.func @transform_6(%arg0: i32) -> (i32, i32) {
    %c0_i32 = arith.constant 0 : i32
    %c0_i32_0 = arith.constant 0 : i32
    %c0_i32_1 = arith.constant 0 : i32
    return %c0_i32, %c0_i32_0 : i32, i32
  }
  func.func @transform_7(%arg0: i32) -> (i32, i32) {
    %c0_i32 = arith.constant 0 : i32
    %c0_i32_0 = arith.constant 0 : i32
    return %arg0, %c0_i32 : i32, i32
  }
}

</mosaic_0001>

<llo_original>
// kernel: tpu_custom_call.1
$region0: #{tpu_custom_call.1}
  #allocation0 [shape = 'u32[]', space=smem, size = 0x4, offset = 0x4, fixed_abs, tag = 'smem constant byte address 0x4 - core index']
  #allocation1 [shape = 'u32[144,128]{1,0:T(1,128)}', space=vmem, size = 0x12000, scoped, tag = 'internal scratch']
  %s0 = inlined_call_operand.vmem [shape: bf16[1024,32], index: 0, kind: input, shape index: {}]
  %s1 = inlined_call_operand.vmem [shape: bf16[32,64], index: 1, kind: input, shape index: {}]
  %s2 = inlined_call_operand.vmem [shape: f32[1,64], index: 2, kind: input, shape index: {}]
  %s3 = inlined_call_operand.vmem [shape: bf16[64,48], index: 3, kind: input, shape index: {}]
  %s4 = inlined_call_operand.vmem [shape: f32[1,48], index: 4, kind: input, shape index: {}]
  %s5 = inlined_call_operand.vmem [shape: bf16[48,128], index: 5, kind: input, shape index: {}]
  %s6 = inlined_call_operand.vmem [shape: f32[1,128], index: 6, kind: input, shape index: {}]
  %s7 = inlined_call_operand.hbm [shape: f32[1024,128], index: 7, kind: output, shape index: {}]
  %s8 = sld [smem:[#allocation0]]
  $region61: #{tpu_custom_call.1} parent=0
    _
  %s10 = ssub.s32 1, %s8
  %s11 = scalar_select 0, %s10, %s8
  $region1: #{tpu_custom_call.1} parent=0
    #allocation2 [shape = 'u8[262144]{0}', space=vmem, size = 0x40000, scoped, tag = 'output window, operand 0']
    #allocation3 [shape = 's32[2]{0}', space=sflag, size = 0x8, scoped, tag = 'scoped memory for tpu_custom_call.1']
    %12 = vsyncpa [#allocation3], 0
    %s13 = scalar_lea.sflag [#allocation3], 1
    %14 = vsyncpa %s13, 0
    loop: start=0, step=1, limit=6
    $region2: #{tpu_custom_call.1} parent=1 // loop_pre_header
      _
    $region3: #{tpu_custom_call.1} parent=1 // loop_header
      %s16 = sphi 0, %s20
      %p17 = scmp.ge.s32.totalorder %s16, 6
      %s26 = sphi 0, %s28
      %s29 = sphi 0, %s26
      %s30 = sphi 0, %s29
      %s46 = sphi 0, %s30
      %s50 = sphi 0, %s50
      %s52 = sphi 0, %s50
      %s53 = sphi 0, %s52
      %s67 = sphi 0, %s53
      %s71 = sphi 0, %s71
      %s73 = sphi 0, %s71
      %s74 = sphi 0, %s73
      %s88 = sphi 0, %s74
      %s92 = sphi 0, %s92
      %s94 = sphi 0, %s92
      %s95 = sphi 0, %s94
      %s109 = sphi 0, %s95
      %s113 = sphi 0, %s113
      %s115 = sphi 0, %s113
      %s116 = sphi 0, %s115
      %s130 = sphi 0, %s116
      %s134 = sphi 0, %s134
      %s136 = sphi 0, %s134
      %s137 = sphi 0, %s136
      %s151 = sphi 0, %s137
      %s155 = sphi 0, %s155
      %s157 = sphi 0, %s155
      %s158 = sphi 0, %s157
      %s172 = sphi 0, %s158
      %s178 = sphi 0, %s180
      %s181 = sphi 0, %s178
      %s182 = sphi 0, %s181
      %s198 = sphi 0, %s182
    $region4: #{tpu_custom_call.1} parent=1 // loop_header_branch
      %19 = sbr.rel (%p17) target = $region8
    $region5: #{tpu_custom_call.1} parent=1 // loop_body
      %s21 = ssub.s32 %s16, 1
      %s22 = ssub.s32 %s16, 2
      %s23 = sadd.s32 %s16, 1
      %s24 = ssub.s32 %s16, %s23
      %p25 = scmp.eq.s32.totalorder %s24, 0
      %s27 = sadd.s32 %s26, 1
      %s28 = scalar_select %p25, %s26, %s27
      %p31 = pneg %p25
      %p32 = scmp.eq.s32.totalorder %s16, 3
      %p33 = por %p31, %p32
      %p34 = scmp.ne.s32.totalorder %s26, %s29
      %p35 = scmp.eq.s32.totalorder %s16, 0
      %p36 = por %p34, %p35
      %p37 = scmp.ne.s32.totalorder %s26, %s29
      %p38 = scmp.eq.s32.totalorder %s21, 3
      %p39 = por %p37, %p38
      %p40 = scmp.ne.s32.totalorder %s29, %s30
      %p41 = scmp.eq.s32.totalorder %s21, 0
      %p42 = por %p40, %p41
      %p43 = scmp.ne.s32.totalorder %s29, %s30
      %p44 = scmp.eq.s32.totalorder %s22, 3
      %p45 = por %p43, %p44
      %p47 = scmp.ne.s32.totalorder %s30, %s46
      %p48 = scmp.eq.s32.totalorder %s22, 0
      %p49 = por %p47, %p48
      %s51 = sadd.s32 %s50, 1
      %p54 = scmp.eq.s32.totalorder %s16, 3
      %p55 = scmp.ne.s32.totalorder %s50, %s52
      %p56 = scmp.eq.s32.totalorder %s16, 0
      %p57 = por %p55, %p56
      %p58 = scmp.ne.s32.totalorder %s50, %s52
      %p59 = scmp.eq.s32.totalorder %s21, 3
      %p60 = por %p58, %p59
      %p61 = scmp.ne.s32.totalorder %s52, %s53
      %p62 = scmp.eq.s32.totalorder %s21, 0
      %p63 = por %p61, %p62
      %p64 = scmp.ne.s32.totalorder %s52, %s53
      %p65 = scmp.eq.s32.totalorder %s22, 3
      %p66 = por %p64, %p65
      %p68 = scmp.ne.s32.totalorder %s53, %s67
      %p69 = scmp.eq.s32.totalorder %s22, 0
      %p70 = por %p68, %p69
      %s72 = sadd.s32 %s71, 1
      %p75 = scmp.eq.s32.totalorder %s16, 3
      %p76 = scmp.ne.s32.totalorder %s71, %s73
      %p77 = scmp.eq.s32.totalorder %s16, 0
      %p78 = por %p76, %p77
      %p79 = scmp.ne.s32.totalorder %s71, %s73
      %p80 = scmp.eq.s32.totalorder %s21, 3
      %p81 = por %p79, %p80
      %p82 = scmp.ne.s32.totalorder %s73, %s74
      %p83 = scmp.eq.s32.totalorder %s21, 0
      %p84 = por %p82, %p83
      %p85 = scmp.ne.s32.totalorder %s73, %s74
      %p86 = scmp.eq.s32.totalorder %s22, 3
      %p87 = por %p85, %p86
      %p89 = scmp.ne.s32.totalorder %s74, %s88
      %p90 = scmp.eq.s32.totalorder %s22, 0
      %p91 = por %p89, %p90
      %s93 = sadd.s32 %s92, 1
      %p96 = scmp.eq.s32.totalorder %s16, 3
      %p97 = scmp.ne.s32.totalorder %s92, %s94
      %p98 = scmp.eq.s32.totalorder %s16, 0
      %p99 = por %p97, %p98
      %p100 = scmp.ne.s32.totalorder %s92, %s94
      %p101 = scmp.eq.s32.totalorder %s21, 3
      %p102 = por %p100, %p101
      %p103 = scmp.ne.s32.totalorder %s94, %s95
      %p104 = scmp.eq.s32.totalorder %s21, 0
      %p105 = por %p103, %p104
      %p106 = scmp.ne.s32.totalorder %s94, %s95
      %p107 = scmp.eq.s32.totalorder %s22, 3
      %p108 = por %p106, %p107
      %p110 = scmp.ne.s32.totalorder %s95, %s109
      %p111 = scmp.eq.s32.totalorder %s22, 0
      %p112 = por %p110, %p111
      %s114 = sadd.s32 %s113, 1
      %p117 = scmp.eq.s32.totalorder %s16, 3
      %p118 = scmp.ne.s32.totalorder %s113, %s115
      %p119 = scmp.eq.s32.totalorder %s16, 0
      %p120 = por %p118, %p119
      %p121 = scmp.ne.s32.totalorder %s113, %s115
      %p122 = scmp.eq.s32.totalorder %s21, 3
      %p123 = por %p121, %p122
      %p124 = scmp.ne.s32.totalorder %s115, %s116
      %p125 = scmp.eq.s32.totalorder %s21, 0
      %p126 = por %p124, %p125
      %p127 = scmp.ne.s32.totalorder %s115, %s116
      %p128 = scmp.eq.s32.totalorder %s22, 3
      %p129 = por %p127, %p128
      %p131 = scmp.ne.s32.totalorder %s116, %s130
      %p132 = scmp.eq.s32.totalorder %s22, 0
      %p133 = por %p131, %p132
      %s135 = sadd.s32 %s134, 1
      %p138 = scmp.eq.s32.totalorder %s16, 3
      %p139 = scmp.ne.s32.totalorder %s134, %s136
      %p140 = scmp.eq.s32.totalorder %s16, 0
      %p141 = por %p139, %p140
      %p142 = scmp.ne.s32.totalorder %s134, %s136
      %p143 = scmp.eq.s32.totalorder %s21, 3
      %p144 = por %p142, %p143
      %p145 = scmp.ne.s32.totalorder %s136, %s137
      %p146 = scmp.eq.s32.totalorder %s21, 0
      %p147 = por %p145, %p146
      %p148 = scmp.ne.s32.totalorder %s136, %s137
      %p149 = scmp.eq.s32.totalorder %s22, 3
      %p150 = por %p148, %p149
      %p152 = scmp.ne.s32.totalorder %s137, %s151
      %p153 = scmp.eq.s32.totalorder %s22, 0
      %p154 = por %p152, %p153
      %s156 = sadd.s32 %s155, 1
      %p159 = scmp.eq.s32.totalorder %s16, 3
      %p160 = scmp.ne.s32.totalorder %s155, %s157
      %p161 = scmp.eq.s32.totalorder %s16, 0
      %p162 = por %p160, %p161
      %p163 = scmp.ne.s32.totalorder %s155, %s157
      %p164 = scmp.eq.s32.totalorder %s21, 3
      %p165 = por %p163, %p164
      %p166 = scmp.ne.s32.totalorder %s157, %s158
      %p167 = scmp.eq.s32.totalorder %s21, 0
      %p168 = por %p166, %p167
      %p169 = scmp.ne.s32.totalorder %s157, %s158
      %p170 = scmp.eq.s32.totalorder %s22, 3
      %p171 = por %p169, %p170
      %p173 = scmp.ne.s32.totalorder %s158, %s172
      %p174 = scmp.eq.s32.totalorder %s22, 0
      %p175 = por %p173, %p174
      %s176 = ssub.s32 %s16, %s23
      %p177 = scmp.eq.s32.totalorder %s176, 0
      %s179 = sadd.s32 %s178, 1
      %s180 = scalar_select %p177, %s178, %s179
      %p183 = pneg %p177
      %p184 = scmp.eq.s32.totalorder %s16, 3
      %p185 = por %p183, %p184
      %p186 = scmp.ne.s32.totalorder %s178, %s181
      %p187 = scmp.eq.s32.totalorder %s16, 0
      %p188 = por %p186, %p187
      %p189 = scmp.ne.s32.totalorder %s178, %s181
      %p190 = scmp.eq.s32.totalorder %s21, 3
      %p191 = por %p189, %p190
      %p192 = scmp.ne.s32.totalorder %s181, %s182
      %p193 = scmp.eq.s32.totalorder %s21, 0
      %p194 = por %p192, %p193
      %p195 = scmp.ne.s32.totalorder %s181, %s182
      %p196 = scmp.eq.s32.totalorder %s22, 3
      %p197 = por %p195, %p196
      %p199 = scmp.ne.s32.totalorder %s182, %s198
      %p200 = scmp.eq.s32.totalorder %s22, 0
      %p201 = por %p199, %p200
      %p202 = scmp.le.s32.totalorder 1, %s16
      %p203 = scmp.lt.s32.totalorder %s16, 5
      %p204 = pnand %p202, %p203
      %p205 = pneg %p204
      // Predicated region
      $region9: #{tpu_custom_call.1} parent=5 // pred_check
        _
      $region10: #{tpu_custom_call.1} parent=5 // pred_check_branch
        %207 = sbr.rel (%p204) target = $region12
      $region11: #{tpu_custom_call.1} parent=5 // pred_region
        %s208 = ssub.s32 %s16, 1
        // Predicated region
        $region13: #{tpu_custom_call.1} parent=11 // pred_check
          %p209 = pneg %p63
        $region14: #{tpu_custom_call.1} parent=11 // pred_check_branch
          %211 = sbr.rel (%p209) target = $region16
        $region15: #{tpu_custom_call.1} parent=11 // pred_region
          _
        $region16: #{tpu_custom_call.1} parent=11 // pred_fallthru
          _
        // Predicated region
        $region17: #{tpu_custom_call.1} parent=11 // pred_check
          %p212 = pneg %p84
        $region18: #{tpu_custom_call.1} parent=11 // pred_check_branch
          %214 = sbr.rel (%p212) target = $region20
        $region19: #{tpu_custom_call.1} parent=11 // pred_region
          _
        $region20: #{tpu_custom_call.1} parent=11 // pred_fallthru
          _
        // Predicated region
        $region21: #{tpu_custom_call.1} parent=11 // pred_check
          %p215 = pneg %p105
        $region22: #{tpu_custom_call.1} parent=11 // pred_check_branch
          %217 = sbr.rel (%p215) target = $region24
        $region23: #{tpu_custom_call.1} parent=11 // pred_region
          _
        $region24: #{tpu_custom_call.1} parent=11 // pred_fallthru
          _
        // Predicated region
        $region25: #{tpu_custom_call.1} parent=11 // pred_check
          %p218 = pneg %p126
        $region26: #{tpu_custom_call.1} parent=11 // pred_check_branch
          %220 = sbr.rel (%p218) target = $region28
        $region27: #{tpu_custom_call.1} parent=11 // pred_region
          _
        $region28: #{tpu_custom_call.1} parent=11 // pred_fallthru
          _
        // Predicated region
        $region29: #{tpu_custom_call.1} parent=11 // pred_check
          %p221 = pneg %p147
        $region30: #{tpu_custom_call.1} parent=11 // pred_check_branch
          %223 = sbr.rel (%p221) target = $region32
        $region31: #{tpu_custom_call.1} parent=11 // pred_region
          _
        $region32: #{tpu_custom_call.1} parent=11 // pred_fallthru
          _
        // Predicated region
        $region33: #{tpu_custom_call.1} parent=11 // pred_check
          %p224 = pneg %p168
        $region34: #{tpu_custom_call.1} parent=11 // pred_check_branch
          %226 = sbr.rel (%p224) target = $region36
        $region35: #{tpu_custom_call.1} parent=11 // pred_region
          _
        $region36: #{tpu_custom_call.1} parent=11 // pred_fallthru
          _
      $region12: #{tpu_custom_call.1} parent=5 // pred_fallthru
        _
      %p227 = scmp.lt.s32.totalorder %s16, 4
      // Predicated region
      $region37: #{tpu_custom_call.1} parent=5 // pred_check
        %p228 = pneg %p227
      $region38: #{tpu_custom_call.1} parent=5 // pred_check_branch
        %230 = sbr.rel (%p228) target = $region40
      $region39: #{tpu_custom_call.1} parent=5 // pred_region
        // Predicated region
        $region41: #{tpu_custom_call.1} parent=39 // pred_check
          %p231 = pneg %p36
        $region42: #{tpu_custom_call.1} parent=39 // pred_check_branch
          %233 = sbr.rel (%p231) target = $region44
        $region43: #{tpu_custom_call.1} parent=39 // pred_region
          %s234 = smul.u32 32, %s16
          %p235 = scmp.lt.s32.totalorder %s234, 127
          %s236 = scalar_select %p235, %s234, 127
          %s237 = smul.addr %s236, 4
          %s238 = scalar_lea.vmem %s0, %s237
          %s239 = smul.u32 32, %s16
        $region44: #{tpu_custom_call.1} parent=39 // pred_fallthru
          _
      $region40: #{tpu_custom_call.1} parent=5 // pred_fallthru
        _
      %p240 = scmp.le.s32.totalorder 1, %s16
      %p241 = scmp.lt.s32.totalorder %s16, 5
      %p242 = pnand %p240, %p241
      %p243 = pneg %p242
      // Predicated region
      $region45: #{tpu_custom_call.1} parent=5 // pred_check
        _
      $region46: #{tpu_custom_call.1} parent=5 // pred_check_branch
        %245 = sbr.rel (%p242) target = $region48
      $region47: #{tpu_custom_call.1} parent=5 // pred_region
        %s246 = ssub.s32 %s16, 1
        %s247 = smul.u32 32, %s21
        %p248 = scmp.lt.s32.totalorder %s247, 127
        %s249 = scalar_select %p248, %s247, 127
        %s250 = smul.addr %s249, 4
        %s251 = scalar_lea.vmem %s0, %s250
        %p252 = pneg %p42
        %p253 = pneg %p39
        %p254 = pneg %p63
        %p255 = pneg %p60
        %p256 = pneg %p84
        %p257 = pneg %p81
        %p258 = pneg %p105
        %p259 = pneg %p102
        %p260 = pneg %p126
        %p261 = pneg %p123
        %p262 = pneg %p147
        %p263 = pneg %p144
        %p264 = pneg %p168
        %p265 = pneg %p165
        %p266 = pneg %p194
        %p267 = pneg %p191
        %s268 = sand.u32 %s181, 1
        %s269 = scalar_lea.sflag [#allocation3], %s268
        %s270 = sand.u32 %s181, 1
        %s271 = smul.addr %s270, 256
        %s272 = scalar_lea.vmem [#allocation2], %s271
        %s273 = smul.u32 32, %s21
        %p274 = scmp.lt.s32.totalorder %s273, 127
        %s275 = scalar_select %p274, %s273, 127
        %s276 = smul.addr %s275, 4
        %s277 = scalar_lea.vmem %s0, %s276
        %s278 = smul.u32 32, %s21
        %s279 = smul.u32 32, %s21
        %v281 = vld [vmem:[%s277] sm:$0xf]
        %v282 = vld [vmem:[%s277 + $0x4] sm:$0xf]
        %v283 = vld [vmem:[%s277 + $0x8] sm:$0xf]
        %v284 = vld [vmem:[%s277 + $0xc] sm:$0xf]
        %v285 = vld [vmem:[%s277 + $0x10] sm:$0xf]
        %v286 = vld [vmem:[%s277 + $0x14] sm:$0xf]
        %v287 = vld [vmem:[%s277 + $0x18] sm:$0xf]
        %v288 = vld [vmem:[%s277 + $0x1c] sm:$0xf]
        %v289 = vld [vmem:[%s277 + $0x20] sm:$0xf]
        %v290 = vld [vmem:[%s277 + $0x24] sm:$0xf]
        %v291 = vld [vmem:[%s277 + $0x28] sm:$0xf]
        %v292 = vld [vmem:[%s277 + $0x2c] sm:$0xf]
        %v293 = vld [vmem:[%s277 + $0x30] sm:$0xf]
        %v294 = vld [vmem:[%s277 + $0x34] sm:$0xf]
        %v295 = vld [vmem:[%s277 + $0x38] sm:$0xf]
        %v296 = vld [vmem:[%s277 + $0x3c] sm:$0xf]
        %v297 = vld [vmem:[%s277 + $0x40] sm:$0xf]
        %v298 = vld [vmem:[%s277 + $0x44] sm:$0xf]
        %v299 = vld [vmem:[%s277 + $0x48] sm:$0xf]
        %v300 = vld [vmem:[%s277 + $0x4c] sm:$0xf]
        %v301 = vld [vmem:[%s277 + $0x50] sm:$0xf]
        %v302 = vld [vmem:[%s277 + $0x54] sm:$0xf]
        %v303 = vld [vmem:[%s277 + $0x58] sm:$0xf]
        %v304 = vld [vmem:[%s277 + $0x5c] sm:$0xf]
        %v305 = vld [vmem:[%s277 + $0x60] sm:$0xf]
        %v306 = vld [vmem:[%s277 + $0x64] sm:$0xf]
        %v307 = vld [vmem:[%s277 + $0x68] sm:$0xf]
        %v308 = vld [vmem:[%s277 + $0x6c] sm:$0xf]
        %v309 = vld [vmem:[%s277 + $0x70] sm:$0xf]
        %v310 = vld [vmem:[%s277 + $0x74] sm:$0xf]
        %v311 = vld [vmem:[%s277 + $0x78] sm:$0xf]
        %v312 = vld [vmem:[%s277 + $0x7c] sm:$0xf]
        %v313 = vld [vmem:[%s1] sm:$0xf]
        %v314 = vld [vmem:[%s1 + $0x4] sm:$0xf]
        %v315 = vld [vmem:[%s1 + $0x8] sm:$0xf]
        %v316 = vld [vmem:[%s1 + $0xc] sm:$0xf]
        %v317 = vld [vmem:[%s2] sm:$0x1]
        %v319 = vlaneseq
        %v320 = vshrl.u32 %v319, 7
        %v321 = vsub.s32 0, %v320
        %v322 = vrot.slane %v317, %v321
        %v356 = vunpack.c.l.b16 %v281
        %v357 = vunpack.c.l.b16 %v282
        %v358 = vunpack.c.l.b16 %v283
        %v359 = vunpack.c.l.b16 %v284
        %v360 = vunpack.c.l.b16 %v285
        %v361 = vunpack.c.l.b16 %v286
        %v362 = vunpack.c.l.b16 %v287
        %v363 = vunpack.c.l.b16 %v288
        %v364 = vunpack.c.l.b16 %v289
        %v365 = vunpack.c.l.b16 %v290
        %v366 = vunpack.c.l.b16 %v291
        %v367 = vunpack.c.l.b16 %v292
        %v368 = vunpack.c.l.b16 %v293
        %v369 = vunpack.c.l.b16 %v294
        %v370 = vunpack.c.l.b16 %v295
        %v371 = vunpack.c.l.b16 %v296
        %v372 = vunpack.c.l.b16 %v297
        %v373 = vunpack.c.l.b16 %v298
        %v374 = vunpack.c.l.b16 %v299
        %v375 = vunpack.c.l.b16 %v300
        %v376 = vunpack.c.l.b16 %v301
        %v377 = vunpack.c.l.b16 %v302
        %v378 = vunpack.c.l.b16 %v303
        %v379 = vunpack.c.l.b16 %v304
        %v380 = vunpack.c.l.b16 %v305
        %v381 = vunpack.c.l.b16 %v306
        %v382 = vunpack.c.l.b16 %v307
        %v383 = vunpack.c.l.b16 %v308
        %v384 = vunpack.c.l.b16 %v309
        %v385 = vunpack.c.l.b16 %v310
        %v386 = vunpack.c.l.b16 %v311
        %v387 = vunpack.c.l.b16 %v312
        %v388 = vpack.c.b16 %v357, %v356
        %v389 = vpack.c.b16 %v359, %v358
        %v390 = vpack.c.b16 %v361, %v360
        %v391 = vpack.c.b16 %v363, %v362
        %v392 = vpack.c.b16 %v365, %v364
        %v393 = vpack.c.b16 %v367, %v366
        %v394 = vpack.c.b16 %v369, %v368
        %v395 = vpack.c.b16 %v371, %v370
        %v396 = vpack.c.b16 %v373, %v372
        %v397 = vpack.c.b16 %v375, %v374
        %v398 = vpack.c.b16 %v377, %v376
        %v399 = vpack.c.b16 %v379, %v378
        %v400 = vpack.c.b16 %v381, %v380
        %v401 = vpack.c.b16 %v383, %v382
        %v402 = vpack.c.b16 %v385, %v384
        %v403 = vpack.c.b16 %v387, %v386
        %v408 = vunpack.c.l.b16 %v313
        %v409 = vunpack.c.l.b16 %v314
        %v410 = vunpack.c.l.b16 %v315
        %v411 = vunpack.c.l.b16 %v316
        %v412 = vpack.c.b16 %v409, %v408
        %v413 = vpack.c.b16 %v411, %v410
        %vm416 = vcmask 261120
        %v418 = vsel %vm416, %v388, 0
        %v421 = vsel %vm416, %v389, 0
        %v424 = vsel %vm416, %v390, 0
        %v427 = vsel %vm416, %v391, 0
        %v430 = vsel %vm416, %v392, 0
        %v433 = vsel %vm416, %v393, 0
        %v436 = vsel %vm416, %v394, 0
        %v439 = vsel %vm416, %v395, 0
        %v442 = vsel %vm416, %v396, 0
        %v445 = vsel %vm416, %v397, 0
        %v448 = vsel %vm416, %v398, 0
        %v451 = vsel %vm416, %v399, 0
        %v454 = vsel %vm416, %v400, 0
        %v457 = vsel %vm416, %v401, 0
        %v460 = vsel %vm416, %v402, 0
        %v463 = vsel %vm416, %v403, 0
        %465 = vmatprep.subr.bf16.mxu0 0
        %466 = vmatpush1.bf16.msra.mxu0 %v412
        %467 = vmatprep.subr.bf16.mxu0 0
        %468 = vmatpush1.bf16.msra.mxu0 %v413
        %469 = vmatprep.subr.bf16.mxu0 0
        %470 = vmatpush1.bf16.msra.mxu0 0
        %471 = vmatprep.subr.bf16.mxu0 0
        %472 = vmatpush1.bf16.msra.mxu0 0
        %473 = vmatprep.subr.bf16.mxu0 0
        %474 = vmatpush1.bf16.msra.mxu0 0
        %475 = vmatprep.subr.bf16.mxu0 0
        %476 = vmatpush1.bf16.msra.mxu0 0
        %477 = vmatprep.subr.bf16.mxu0 0
        %478 = vmatpush1.bf16.msra.mxu0 0
        %479 = vmatprep.subr.bf16.mxu0 0
        %480 = vmatpush1.bf16.msra.mxu0 0
        %481 = vmatprep.subr.bf16.mxu0 0
        %482 = vmatpush1.bf16.msra.mxu0 0
        %483 = vmatprep.subr.bf16.mxu0 0
        %484 = vmatpush1.bf16.msra.mxu0 0
        %485 = vmatprep.subr.bf16.mxu0 0
        %486 = vmatpush1.bf16.msra.mxu0 0
        %487 = vmatprep.subr.bf16.mxu0 0
        %488 = vmatpush1.bf16.msra.mxu0 0
        %489 = vmatprep.subr.bf16.mxu0 0
        %490 = vmatpush1.bf16.msra.mxu0 0
        %491 = vmatprep.subr.bf16.mxu0 0
        %492 = vmatpush1.bf16.msra.mxu0 0
        %493 = vmatprep.subr.bf16.mxu0 0
        %494 = vmatpush1.bf16.msra.mxu0 0
        %495 = vmatprep.subr.bf16.mxu0 0
        %496 = vmatpush1.bf16.msra.mxu0 0
        %497 = vmatprep.mubr.bf16.mxu0 0
        %498 = vmatmul.mubr.bf16.gmra.mrb[0].mxu0 %v418
        %v499 = vpop.f32.mrb[0].mxu0
        %v500 = vadd.f32 %v322, %v499
        %v501 = vpop.f32.mrb[0].mxu0
        %v502 = vpop.f32.mrb[0].mxu0
        %v503 = vadd.f32 %v322, %v502
        %v504 = vpop.f32.mrb[0].mxu0
        %505 = vmatprep.mubr.bf16.mxu0 0
        %506 = vmatmul.mubr.bf16.gmra.mrb[0].mxu0 %v421
        %v507 = vpop.f32.mrb[0].mxu0
        %v508 = vadd.f32 %v322, %v507
        %v509 = vpop.f32.mrb[0].mxu0
        %v510 = vpop.f32.mrb[0].mxu0
        %v511 = vadd.f32 %v322, %v510
        %v512 = vpop.f32.mrb[0].mxu0
        %513 = vmatprep.mubr.bf16.mxu0 0
        %514 = vmatmul.mubr.bf16.gmra.mrb[0].mxu0 %v424
        %v515 = vpop.f32.mrb[0].mxu0
        %v516 = vadd.f32 %v322, %v515
        %v517 = vpop.f32.mrb[0].mxu0
        %v518 = vpop.f32.mrb[0].mxu0
        %v519 = vadd.f32 %v322, %v518
        %v520 = vpop.f32.mrb[0].mxu0
        %521 = vmatprep.mubr.bf16.mxu0 0
        %522 = vmatmul.mubr.bf16.gmra.mrb[0].mxu0 %v427
        %v523 = vpop.f32.mrb[0].mxu0
        %v524 = vadd.f32 %v322, %v523
        %v525 = vpop.f32.mrb[0].mxu0
        %v526 = vpop.f32.mrb[0].mxu0
        %v527 = vadd.f32 %v322, %v526
        %v528 = vpop.f32.mrb[0].mxu0
        %529 = vmatprep.mubr.bf16.mxu0 0
        %530 = vmatmul.mubr.bf16.gmra.mrb[0].mxu0 %v430
        %v531 = vpop.f32.mrb[0].mxu0
        %v532 = vadd.f32 %v322, %v531
        %v533 = vpop.f32.mrb[0].mxu0
        %v534 = vpop.f32.mrb[0].mxu0
        %v535 = vadd.f32 %v322, %v534
        %v536 = vpop.f32.mrb[0].mxu0
        %537 = vmatprep.mubr.bf16.mxu0 0
        %538 = vmatmul.mubr.bf16.gmra.mrb[0].mxu0 %v433
        %v539 = vpop.f32.mrb[0].mxu0
        %v540 = vadd.f32 %v322, %v539
        %v541 = vpop.f32.mrb[0].mxu0
        %v542 = vpop.f32.mrb[0].mxu0
        %v543 = vadd.f32 %v322, %v542
        %v544 = vpop.f32.mrb[0].mxu0
        %545 = vmatprep.mubr.bf16.mxu0 0
        %546 = vmatmul.mubr.bf16.gmra.mrb[0].mxu0 %v436
        %v547 = vpop.f32.mrb[0].mxu0
        %v548 = vadd.f32 %v322, %v547
        %v549 = vpop.f32.mrb[0].mxu0
        %v550 = vpop.f32.mrb[0].mxu0
        %v551 = vadd.f32 %v322, %v550
        %v552 = vpop.f32.mrb[0].mxu0
        %553 = vmatprep.mubr.bf16.mxu0 0
        %554 = vmatmul.mubr.bf16.gmra.mrb[0].mxu0 %v439
        %v555 = vpop.f32.mrb[0].mxu0
        %v556 = vadd.f32 %v322, %v555
        %v557 = vpop.f32.mrb[0].mxu0
        %v558 = vpop.f32.mrb[0].mxu0
        %v559 = vadd.f32 %v322, %v558
        %v560 = vpop.f32.mrb[0].mxu0
        %561 = vmatprep.mubr.bf16.mxu0 0
        %562 = vmatmul.mubr.bf16.gmra.mrb[0].mxu0 %v442
        %v563 = vpop.f32.mrb[0].mxu0
        %v564 = vadd.f32 %v322, %v563
        %v565 = vpop.f32.mrb[0].mxu0
        %v566 = vpop.f32.mrb[0].mxu0
        %v567 = vadd.f32 %v322, %v566
        %v568 = vpop.f32.mrb[0].mxu0
        %569 = vmatprep.mubr.bf16.mxu0 0
        %570 = vmatmul.mubr.bf16.gmra.mrb[0].mxu0 %v445
        %v571 = vpop.f32.mrb[0].mxu0
        %v572 = vadd.f32 %v322, %v571
        %v573 = vpop.f32.mrb[0].mxu0
        %v574 = vpop.f32.mrb[0].mxu0
        %v575 = vadd.f32 %v322, %v574
        %v576 = vpop.f32.mrb[0].mxu0
        %577 = vmatprep.mubr.bf16.mxu0 0
        %578 = vmatmul.mubr.bf16.gmra.mrb[0].mxu0 %v448
        %v579 = vpop.f32.mrb[0].mxu0
        %v580 = vadd.f32 %v322, %v579
        %v581 = vpop.f32.mrb[0].mxu0
        %v582 = vpop.f32.mrb[0].mxu0
        %v583 = vadd.f32 %v322, %v582
        %v584 = vpop.f32.mrb[0].mxu0
        %585 = vmatprep.mubr.bf16.mxu0 0
        %586 = vmatmul.mubr.bf16.gmra.mrb[0].mxu0 %v451
        %v587 = vpop.f32.mrb[0].mxu0
        %v588 = vadd.f32 %v322, %v587
        %v589 = vpop.f32.mrb[0].mxu0
        %v590 = vpop.f32.mrb[0].mxu0
        %v591 = vadd.f32 %v322, %v590
        %v592 = vpop.f32.mrb[0].mxu0
        %593 = vmatprep.mubr.bf16.mxu0 0
        %594 = vmatmul.mubr.bf16.gmra.mrb[0].mxu0 %v454
        %v595 = vpop.f32.mrb[0].mxu0
        %v596 = vadd.f32 %v322, %v595
        %v597 = vpop.f32.mrb[0].mxu0
        %v598 = vpop.f32.mrb[0].mxu0
        %v599 = vadd.f32 %v322, %v598
        %v600 = vpop.f32.mrb[0].mxu0
        %601 = vmatprep.mubr.bf16.mxu0 0
        %602 = vmatmul.mubr.bf16.gmra.mrb[0].mxu0 %v457
        %v603 = vpop.f32.mrb[0].mxu0
        %v604 = vadd.f32 %v322, %v603
        %v605 = vpop.f32.mrb[0].mxu0
        %v606 = vpop.f32.mrb[0].mxu0
        %v607 = vadd.f32 %v322, %v606
        %v608 = vpop.f32.mrb[0].mxu0
        %609 = vmatprep.mubr.bf16.mxu0 0
        %610 = vmatmul.mubr.bf16.gmra.mrb[0].mxu0 %v460
        %v611 = vpop.f32.mrb[0].mxu0
        %v612 = vadd.f32 %v322, %v611
        %v613 = vpop.f32.mrb[0].mxu0
        %v614 = vpop.f32.mrb[0].mxu0
        %v615 = vadd.f32 %v322, %v614
        %v616 = vpop.f32.mrb[0].mxu0
        %617 = vmatprep.mubr.bf16.mxu0 0
        %618 = vmatmul.mubr.bf16.gmra.mrb[0].mxu0 %v463
        %v619 = vpop.f32.mrb[0].mxu0
        %v620 = vadd.f32 %v322, %v619
        %v621 = vpop.f32.mrb[0].mxu0
        %v622 = vpop.f32.mrb[0].mxu0
        %v623 = vadd.f32 %v322, %v622
        %v624 = vpop.f32.mrb[0].mxu0
        %625 = vdwg.mxu0
        %v626 = vmax.f32 %v500, 0.0
        %v627 = vmax.f32 %v503, 0.0
        %v628 = vmax.f32 %v508, 0.0
        %v629 = vmax.f32 %v511, 0.0
        %v630 = vmax.f32 %v516, 0.0
        %v631 = vmax.f32 %v519, 0.0
        %v632 = vmax.f32 %v524, 0.0
        %v633 = vmax.f32 %v527, 0.0
        %v634 = vmax.f32 %v532, 0.0
        %v635 = vmax.f32 %v535, 0.0
        %v636 = vmax.f32 %v540, 0.0
        %v637 = vmax.f32 %v543, 0.0
        %v638 = vmax.f32 %v548, 0.0
        %v639 = vmax.f32 %v551, 0.0
        %v640 = vmax.f32 %v556, 0.0
        %v641 = vmax.f32 %v559, 0.0
        %v642 = vmax.f32 %v564, 0.0
        %v643 = vmax.f32 %v567, 0.0
        %v644 = vmax.f32 %v572, 0.0
        %v645 = vmax.f32 %v575, 0.0
        %v646 = vmax.f32 %v580, 0.0
        %v647 = vmax.f32 %v583, 0.0
        %v648 = vmax.f32 %v588, 0.0
        %v649 = vmax.f32 %v591, 0.0
        %v650 = vmax.f32 %v596, 0.0
        %v651 = vmax.f32 %v599, 0.0
        %v652 = vmax.f32 %v604, 0.0
        %v653 = vmax.f32 %v607, 0.0
        %v654 = vmax.f32 %v612, 0.0
        %v655 = vmax.f32 %v615, 0.0
        %v656 = vmax.f32 %v620, 0.0
        %v657 = vmax.f32 %v623, 0.0
        %v658 = vpack.c.bf16 %v627, %v626
        %v659 = vpack.c.bf16 %v629, %v628
        %v660 = vpack.c.bf16 %v631, %v630
        %v661 = vpack.c.bf16 %v633, %v632
        %v662 = vpack.c.bf16 %v635, %v634
        %v663 = vpack.c.bf16 %v637, %v636
        %v664 = vpack.c.bf16 %v639, %v638
        %v665 = vpack.c.bf16 %v641, %v640
        %v666 = vpack.c.bf16 %v643, %v642
        %v667 = vpack.c.bf16 %v645, %v644
        %v668 = vpack.c.bf16 %v647, %v646
        %v669 = vpack.c.bf16 %v649, %v648
        %v670 = vpack.c.bf16 %v651, %v650
        %v671 = vpack.c.bf16 %v653, %v652
        %v672 = vpack.c.bf16 %v655, %v654
        %v673 = vpack.c.bf16 %v657, %v656
        %v674 = vld [vmem:[%s3] sm:$0xf]
        %v675 = vld [vmem:[%s3 + $0x4] sm:$0xf]
        %v676 = vld [vmem:[%s3 + $0x8] sm:$0xf]
        %v677 = vld [vmem:[%s3 + $0xc] sm:$0xf]
        %v678 = vld [vmem:[%s3 + $0x10] sm:$0xf]
        %v679 = vld [vmem:[%s3 + $0x14] sm:$0xf]
        %v680 = vld [vmem:[%s3 + $0x18] sm:$0xf]
        %v681 = vld [vmem:[%s3 + $0x1c] sm:$0xf]
        %v682 = vld [vmem:[%s4] sm:$0x1]
        %v684 = vlaneseq
        %v685 = vshrl.u32 %v684, 7
        %v686 = vsub.s32 0, %v685
        %v687 = vrot.slane %v682, %v686
        %v697 = vunpack.c.l.b16 %v674
        %v698 = vunpack.c.l.b16 %v675
        %v699 = vunpack.c.l.b16 %v676
        %v700 = vunpack.c.l.b16 %v677
        %v701 = vunpack.c.l.b16 %v678
        %v702 = vunpack.c.l.b16 %v679
        %v703 = vunpack.c.l.b16 %v680
        %v704 = vunpack.c.l.b16 %v681
        %v705 = vpack.c.b16 %v698, %v697
        %v706 = vpack.c.b16 %v700, %v699
        %v707 = vpack.c.b16 %v702, %v701
        %v708 = vpack.c.b16 %v704, %v703
        %vm713 = vcmask 523264
        %v715 = vsel %vm713, %v658, 0
        %v718 = vsel %vm713, %v659, 0
        %v721 = vsel %vm713, %v660, 0
        %v724 = vsel %vm713, %v661, 0
        %v727 = vsel %vm713, %v662, 0
        %v730 = vsel %vm713, %v663, 0
        %v733 = vsel %vm713, %v664, 0
        %v736 = vsel %vm713, %v665, 0
        %v739 = vsel %vm713, %v666, 0
        %v742 = vsel %vm713, %v667, 0
        %v745 = vsel %vm713, %v668, 0
        %v748 = vsel %vm713, %v669, 0
        %v751 = vsel %vm713, %v670, 0
        %v754 = vsel %vm713, %v671, 0
        %v757 = vsel %vm713, %v672, 0
        %v760 = vsel %vm713, %v673, 0
        %762 = vmatprep.subr.bf16.mxu0 0
        %763 = vmatpush1.bf16.msra.mxu0 %v705
        %764 = vmatprep.subr.bf16.mxu0 0
        %765 = vmatpush1.bf16.msra.mxu0 %v706
        %766 = vmatprep.subr.bf16.mxu0 0
        %767 = vmatpush1.bf16.msra.mxu0 %v707
        %768 = vmatprep.subr.bf16.mxu0 0
        %769 = vmatpush1.bf16.msra.mxu0 %v708
        %770 = vmatprep.subr.bf16.mxu0 0
        %771 = vmatpush1.bf16.msra.mxu0 0
        %772 = vmatprep.subr.bf16.mxu0 0
        %773 = vmatpush1.bf16.msra.mxu0 0
        %774 = vmatprep.subr.bf16.mxu0 0
        %775 = vmatpush1.bf16.msra.mxu0 0
        %776 = vmatprep.subr.bf16.mxu0 0
        %777 = vmatpush1.bf16.msra.mxu0 0
        %778 = vmatprep.subr.bf16.mxu0 0
        %779 = vmatpush1.bf16.msra.mxu0 0
        %780 = vmatprep.subr.bf16.mxu0 0
        %781 = vmatpush1.bf16.msra.mxu0 0
        %782 = vmatprep.subr.bf16.mxu0 0
        %783 = vmatpush1.bf16.msra.mxu0 0
        %784 = vmatprep.subr.bf16.mxu0 0
        %785 = vmatpush1.bf16.msra.mxu0 0
        %786 = vmatprep.subr.bf16.mxu0 0
        %787 = vmatpush1.bf16.msra.mxu0 0
        %788 = vmatprep.subr.bf16.mxu0 0
        %789 = vmatpush1.bf16.msra.mxu0 0
        %790 = vmatprep.subr.bf16.mxu0 0
        %791 = vmatpush1.bf16.msra.mxu0 0
        %792 = vmatprep.subr.bf16.mxu0 0
        %793 = vmatpush1.bf16.msra.mxu0 0
        %794 = vmatprep.mubr.bf16.mxu0 0
        %795 = vmatmul.mubr.bf16.gmra.mrb[0].mxu0 %v715
        %v796 = vpop.f32.mrb[0].mxu0
        %v797 = vadd.f32 %v687, %v796
        %v798 = vpop.f32.mrb[0].mxu0
        %v799 = vpop.f32.mrb[0].mxu0
        %v800 = vadd.f32 %v687, %v799
        %v801 = vpop.f32.mrb[0].mxu0
        %802 = vmatprep.mubr.bf16.mxu0 0
        %803 = vmatmul.mubr.bf16.gmra.mrb[0].mxu0 %v718
        %v804 = vpop.f32.mrb[0].mxu0
        %v805 = vadd.f32 %v687, %v804
        %v806 = vpop.f32.mrb[0].mxu0
        %v807 = vpop.f32.mrb[0].mxu0
        %v808 = vadd.f32 %v687, %v807
        %v809 = vpop.f32.mrb[0].mxu0
        %810 = vmatprep.mubr.bf16.mxu0 0
        %811 = vmatmul.mubr.bf16.gmra.mrb[0].mxu0 %v721
        %v812 = vpop.f32.mrb[0].mxu0
        %v813 = vadd.f32 %v687, %v812
        %v814 = vpop.f32.mrb[0].mxu0
        %v815 = vpop.f32.mrb[0].mxu0
        %v816 = vadd.f32 %v687, %v815
        %v817 = vpop.f32.mrb[0].mxu0
        %818 = vmatprep.mubr.bf16.mxu0 0
        %819 = vmatmul.mubr.bf16.gmra.mrb[0].mxu0 %v724
        %v820 = vpop.f32.mrb[0].mxu0
        %v821 = vadd.f32 %v687, %v820
        %v822 = vpop.f32.mrb[0].mxu0
        %v823 = vpop.f32.mrb[0].mxu0
        %v824 = vadd.f32 %v687, %v823
        %v825 = vpop.f32.mrb[0].mxu0
        %826 = vmatprep.mubr.bf16.mxu0 0
        %827 = vmatmul.mubr.bf16.gmra.mrb[0].mxu0 %v727
        %v828 = vpop.f32.mrb[0].mxu0
        %v829 = vadd.f32 %v687, %v828
        %v830 = vpop.f32.mrb[0].mxu0
        %v831 = vpop.f32.mrb[0].mxu0
        %v832 = vadd.f32 %v687, %v831
        %v833 = vpop.f32.mrb[0].mxu0
        %834 = vmatprep.mubr.bf16.mxu0 0
        %835 = vmatmul.mubr.bf16.gmra.mrb[0].mxu0 %v730
        %v836 = vpop.f32.mrb[0].mxu0
        %v837 = vadd.f32 %v687, %v836
        %v838 = vpop.f32.mrb[0].mxu0
        %v839 = vpop.f32.mrb[0].mxu0
        %v840 = vadd.f32 %v687, %v839
        %v841 = vpop.f32.mrb[0].mxu0
        %842 = vmatprep.mubr.bf16.mxu0 0
        %843 = vmatmul.mubr.bf16.gmra.mrb[0].mxu0 %v733
        %v844 = vpop.f32.mrb[0].mxu0
        %v845 = vadd.f32 %v687, %v844
        %v846 = vpop.f32.mrb[0].mxu0
        %v847 = vpop.f32.mrb[0].mxu0
        %v848 = vadd.f32 %v687, %v847
        %v849 = vpop.f32.mrb[0].mxu0
        %850 = vmatprep.mubr.bf16.mxu0 0
        %851 = vmatmul.mubr.bf16.gmra.mrb[0].mxu0 %v736
        %v852 = vpop.f32.mrb[0].mxu0
        %v853 = vadd.f32 %v687, %v852
        %v854 = vpop.f32.mrb[0].mxu0
        %v855 = vpop.f32.mrb[0].mxu0
        %v856 = vadd.f32 %v687, %v855
        %v857 = vpop.f32.mrb[0].mxu0
        %858 = vmatprep.mubr.bf16.mxu0 0
        %859 = vmatmul.mubr.bf16.gmra.mrb[0].mxu0 %v739
        %v860 = vpop.f32.mrb[0].mxu0
        %v861 = vadd.f32 %v687, %v860
        %v862 = vpop.f32.mrb[0].mxu0
        %v863 = vpop.f32.mrb[0].mxu0
        %v864 = vadd.f32 %v687, %v863
        %v865 = vpop.f32.mrb[0].mxu0
        %866 = vmatprep.mubr.bf16.mxu0 0
        %867 = vmatmul.mubr.bf16.gmra.mrb[0].mxu0 %v742
        %v868 = vpop.f32.mrb[0].mxu0
        %v869 = vadd.f32 %v687, %v868
        %v870 = vpop.f32.mrb[0].mxu0
        %v871 = vpop.f32.mrb[0].mxu0
        %v872 = vadd.f32 %v687, %v871
        %v873 = vpop.f32.mrb[0].mxu0
        %874 = vmatprep.mubr.bf16.mxu0 0
        %875 = vmatmul.mubr.bf16.gmra.mrb[0].mxu0 %v745
        %v876 = vpop.f32.mrb[0].mxu0
        %v877 = vadd.f32 %v687, %v876
        %v878 = vpop.f32.mrb[0].mxu0
        %v879 = vpop.f32.mrb[0].mxu0
        %v880 = vadd.f32 %v687, %v879
        %v881 = vpop.f32.mrb[0].mxu0
        %882 = vmatprep.mubr.bf16.mxu0 0
        %883 = vmatmul.mubr.bf16.gmra.mrb[0].mxu0 %v748
        %v884 = vpop.f32.mrb[0].mxu0
        %v885 = vadd.f32 %v687, %v884
        %v886 = vpop.f32.mrb[0].mxu0
        %v887 = vpop.f32.mrb[0].mxu0
        %v888 = vadd.f32 %v687, %v887
        %v889 = vpop.f32.mrb[0].mxu0
        %890 = vmatprep.mubr.bf16.mxu0 0
        %891 = vmatmul.mubr.bf16.gmra.mrb[0].mxu0 %v751
        %v892 = vpop.f32.mrb[0].mxu0
        %v893 = vadd.f32 %v687, %v892
        %v894 = vpop.f32.mrb[0].mxu0
        %v895 = vpop.f32.mrb[0].mxu0
        %v896 = vadd.f32 %v687, %v895
        %v897 = vpop.f32.mrb[0].mxu0
        %898 = vmatprep.mubr.bf16.mxu0 0
        %899 = vmatmul.mubr.bf16.gmra.mrb[0].mxu0 %v754
        %v900 = vpop.f32.mrb[0].mxu0
        %v901 = vadd.f32 %v687, %v900
        %v902 = vpop.f32.mrb[0].mxu0
        %v903 = vpop.f32.mrb[0].mxu0
        %v904 = vadd.f32 %v687, %v903
        %v905 = vpop.f32.mrb[0].mxu0
        %906 = vmatprep.mubr.bf16.mxu0 0
        %907 = vmatmul.mubr.bf16.gmra.mrb[0].mxu0 %v757
        %v908 = vpop.f32.mrb[0].mxu0
        %v909 = vadd.f32 %v687, %v908
        %v910 = vpop.f32.mrb[0].mxu0
        %v911 = vpop.f32.mrb[0].mxu0
        %v912 = vadd.f32 %v687, %v911
        %v913 = vpop.f32.mrb[0].mxu0
        %914 = vmatprep.mubr.bf16.mxu0 0
        %915 = vmatmul.mubr.bf16.gmra.mrb[0].mxu0 %v760
        %v916 = vpop.f32.mrb[0].mxu0
        %v917 = vadd.f32 %v687, %v916
        %v918 = vpop.f32.mrb[0].mxu0
        %v919 = vpop.f32.mrb[0].mxu0
        %v920 = vadd.f32 %v687, %v919
        %v921 = vpop.f32.mrb[0].mxu0
        %922 = vdwg.mxu0
        %v923 = vmax.f32 %v797, 0.0
        %v924 = vmax.f32 %v800, 0.0
        %v925 = vmax.f32 %v805, 0.0
        %v926 = vmax.f32 %v808, 0.0
        %v927 = vmax.f32 %v813, 0.0
        %v928 = vmax.f32 %v816, 0.0
        %v929 = vmax.f32 %v821, 0.0
        %v930 = vmax.f32 %v824, 0.0
        %v931 = vmax.f32 %v829, 0.0
        %v932 = vmax.f32 %v832, 0.0
        %v933 = vmax.f32 %v837, 0.0
        %v934 = vmax.f32 %v840, 0.0
        %v935 = vmax.f32 %v845, 0.0
        %v936 = vmax.f32 %v848, 0.0
        %v937 = vmax.f32 %v853, 0.0
        %v938 = vmax.f32 %v856, 0.0
        %v939 = vmax.f32 %v861, 0.0
        %v940 = vmax.f32 %v864, 0.0
        %v941 = vmax.f32 %v869, 0.0
        %v942 = vmax.f32 %v872, 0.0
        %v943 = vmax.f32 %v877, 0.0
        %v944 = vmax.f32 %v880, 0.0
        %v945 = vmax.f32 %v885, 0.0
        %v946 = vmax.f32 %v888, 0.0
        %v947 = vmax.f32 %v893, 0.0
        %v948 = vmax.f32 %v896, 0.0
        %v949 = vmax.f32 %v901, 0.0
        %v950 = vmax.f32 %v904, 0.0
        %v951 = vmax.f32 %v909, 0.0
        %v952 = vmax.f32 %v912, 0.0
        %v953 = vmax.f32 %v917, 0.0
        %v954 = vmax.f32 %v920, 0.0
        %v955 = vpack.c.bf16 %v924, %v923
        %v956 = vpack.c.bf16 %v926, %v925
        %v957 = vpack.c.bf16 %v928, %v927
        %v958 = vpack.c.bf16 %v930, %v929
        %v959 = vpack.c.bf16 %v932, %v931
        %v960 = vpack.c.bf16 %v934, %v933
        %v961 = vpack.c.bf16 %v936, %v935
        %v962 = vpack.c.bf16 %v938, %v937
        %v963 = vpack.c.bf16 %v940, %v939
        %v964 = vpack.c.bf16 %v942, %v941
        %v965 = vpack.c.bf16 %v944, %v943
        %v966 = vpack.c.bf16 %v946, %v945
        %v967 = vpack.c.bf16 %v948, %v947
        %v968 = vpack.c.bf16 %v950, %v949
        %v969 = vpack.c.bf16 %v952, %v951
        %v970 = vpack.c.bf16 %v954, %v953
        %v971 = vld [vmem:[%s5] sm:$0xf]
        %v972 = vld [vmem:[%s5 + $0x4] sm:$0xf]
        %v973 = vld [vmem:[%s5 + $0x8] sm:$0xf]
        %v974 = vld [vmem:[%s5 + $0xc] sm:$0xf]
        %v975 = vld [vmem:[%s5 + $0x10] sm:$0xf]
        %v976 = vld [vmem:[%s5 + $0x14] sm:$0xf]
        %v977 = vld [vmem:[%s6] sm:$0x1]
        %v979 = vlaneseq
        %v980 = vshrl.u32 %v979, 7
        %v981 = vsub.s32 0, %v980
        %v982 = vrot.slane %v977, %v981
        %v990 = vunpack.c.l.b16 %v971
        %v991 = vunpack.c.l.b16 %v972
        %v992 = vunpack.c.l.b16 %v973
        %v993 = vunpack.c.l.b16 %v974
        %v994 = vunpack.c.l.b16 %v975
        %v995 = vunpack.c.l.b16 %v976
        %v996 = vpack.c.b16 %v991, %v990
        %v997 = vpack.c.b16 %v993, %v992
        %v998 = vpack.c.b16 %v995, %v994
        %vm1002 = vcmask 392192
        %v1004 = vsel %vm1002, %v955, 0
        %v1007 = vsel %vm1002, %v956, 0
        %v1010 = vsel %vm1002, %v957, 0
        %v1013 = vsel %vm1002, %v958, 0
        %v1016 = vsel %vm1002, %v959, 0
        %v1019 = vsel %vm1002, %v960, 0
        %v1022 = vsel %vm1002, %v961, 0
        %v1025 = vsel %vm1002, %v962, 0
        %v1028 = vsel %vm1002, %v963, 0
        %v1031 = vsel %vm1002, %v964, 0
        %v1034 = vsel %vm1002, %v965, 0
        %v1037 = vsel %vm1002, %v966, 0
        %v1040 = vsel %vm1002, %v967, 0
        %v1043 = vsel %vm1002, %v968, 0
        %v1046 = vsel %vm1002, %v969, 0
        %v1049 = vsel %vm1002, %v970, 0
        %1051 = vmatprep.subr.bf16.mxu0 0
        %1052 = vmatpush1.bf16.msra.mxu0 %v996
        %1053 = vmatprep.subr.bf16.mxu0 0
        %1054 = vmatpush1.bf16.msra.mxu0 %v997
        %1055 = vmatprep.subr.bf16.mxu0 0
        %1056 = vmatpush1.bf16.msra.mxu0 %v998
        %1057 = vmatprep.subr.bf16.mxu0 0
        %1058 = vmatpush1.bf16.msra.mxu0 0
        %1059 = vmatprep.subr.bf16.mxu0 0
        %1060 = vmatpush1.bf16.msra.mxu0 0
        %1061 = vmatprep.subr.bf16.mxu0 0
        %1062 = vmatpush1.bf16.msra.mxu0 0
        %1063 = vmatprep.subr.bf16.mxu0 0
        %1064 = vmatpush1.bf16.msra.mxu0 0
        %1065 = vmatprep.subr.bf16.mxu0 0
        %1066 = vmatpush1.bf16.msra.mxu0 0
        %1067 = vmatprep.subr.bf16.mxu0 0
        %1068 = vmatpush1.bf16.msra.mxu0 0
        %1069 = vmatprep.subr.bf16.mxu0 0
        %1070 = vmatpush1.bf16.msra.mxu0 0
        %1071 = vmatprep.subr.bf16.mxu0 0
        %1072 = vmatpush1.bf16.msra.mxu0 0
        %1073 = vmatprep.subr.bf16.mxu0 0
        %1074 = vmatpush1.bf16.msra.mxu0 0
        %1075 = vmatprep.subr.bf16.mxu0 0
        %1076 = vmatpush1.bf16.msra.mxu0 0
        %1077 = vmatprep.subr.bf16.mxu0 0
        %1078 = vmatpush1.bf16.msra.mxu0 0
        %1079 = vmatprep.subr.bf16.mxu0 0
        %1080 = vmatpush1.bf16.msra.mxu0 0
        %1081 = vmatprep.subr.bf16.mxu0 0
        %1082 = vmatpush1.bf16.msra.mxu0 0
        %1083 = vmatprep.mubr.bf16.mxu0 0
        %1084 = vmatmul.mubr.bf16.gmra.mrb[0].mxu0 %v1004
        %v1085 = vpop.f32.mrb[0].mxu0
        %v1086 = vadd.f32 %v982, %v1085
        %v1087 = vpop.f32.mrb[0].mxu0
        %v1088 = vpop.f32.mrb[0].mxu0
        %v1089 = vadd.f32 %v982, %v1088
        %v1090 = vpop.f32.mrb[0].mxu0
        %1091 = vmatprep.mubr.bf16.mxu0 0
        %1092 = vmatmul.mubr.bf16.gmra.mrb[0].mxu0 %v1007
        %v1093 = vpop.f32.mrb[0].mxu0
        %v1094 = vadd.f32 %v982, %v1093
        %v1095 = vpop.f32.mrb[0].mxu0
        %v1096 = vpop.f32.mrb[0].mxu0
        %v1097 = vadd.f32 %v982, %v1096
        %v1098 = vpop.f32.mrb[0].mxu0
        %1099 = vmatprep.mubr.bf16.mxu0 0
        %1100 = vmatmul.mubr.bf16.gmra.mrb[0].mxu0 %v1010
        %v1101 = vpop.f32.mrb[0].mxu0
        %v1102 = vadd.f32 %v982, %v1101
        %v1103 = vpop.f32.mrb[0].mxu0
        %v1104 = vpop.f32.mrb[0].mxu0
        %v1105 = vadd.f32 %v982, %v1104
        %v1106 = vpop.f32.mrb[0].mxu0
        %1107 = vmatprep.mubr.bf16.mxu0 0
        %1108 = vmatmul.mubr.bf16.gmra.mrb[0].mxu0 %v1013
        %v1109 = vpop.f32.mrb[0].mxu0
        %v1110 = vadd.f32 %v982, %v1109
        %v1111 = vpop.f32.mrb[0].mxu0
        %v1112 = vpop.f32.mrb[0].mxu0
        %v1113 = vadd.f32 %v982, %v1112
        %v1114 = vpop.f32.mrb[0].mxu0
        %1115 = vmatprep.mubr.bf16.mxu0 0
        %1116 = vmatmul.mubr.bf16.gmra.mrb[0].mxu0 %v1016
        %v1117 = vpop.f32.mrb[0].mxu0
        %v1118 = vadd.f32 %v982, %v1117
        %v1119 = vpop.f32.mrb[0].mxu0
        %v1120 = vpop.f32.mrb[0].mxu0
        %v1121 = vadd.f32 %v982, %v1120
        %v1122 = vpop.f32.mrb[0].mxu0
        %1123 = vmatprep.mubr.bf16.mxu0 0
        %1124 = vmatmul.mubr.bf16.gmra.mrb[0].mxu0 %v1019
        %v1125 = vpop.f32.mrb[0].mxu0
        %v1126 = vadd.f32 %v982, %v1125
        %v1127 = vpop.f32.mrb[0].mxu0
        %v1128 = vpop.f32.mrb[0].mxu0
        %v1129 = vadd.f32 %v982, %v1128
        %v1130 = vpop.f32.mrb[0].mxu0
        %1131 = vmatprep.mubr.bf16.mxu0 0
        %1132 = vmatmul.mubr.bf16.gmra.mrb[0].mxu0 %v1022
        %v1133 = vpop.f32.mrb[0].mxu0
        %v1134 = vadd.f32 %v982, %v1133
        %v1135 = vpop.f32.mrb[0].mxu0
        %v1136 = vpop.f32.mrb[0].mxu0
        %v1137 = vadd.f32 %v982, %v1136
        %v1138 = vpop.f32.mrb[0].mxu0
        %1139 = vmatprep.mubr.bf16.mxu0 0
        %1140 = vmatmul.mubr.bf16.gmra.mrb[0].mxu0 %v1025
        %v1141 = vpop.f32.mrb[0].mxu0
        %v1142 = vadd.f32 %v982, %v1141
        %v1143 = vpop.f32.mrb[0].mxu0
        %v1144 = vpop.f32.mrb[0].mxu0
        %v1145 = vadd.f32 %v982, %v1144
        %v1146 = vpop.f32.mrb[0].mxu0
        %1147 = vmatprep.mubr.bf16.mxu0 0
        %1148 = vmatmul.mubr.bf16.gmra.mrb[0].mxu0 %v1028
        %v1149 = vpop.f32.mrb[0].mxu0
        %v1150 = vadd.f32 %v982, %v1149
        %v1151 = vpop.f32.mrb[0].mxu0
        %v1152 = vpop.f32.mrb[0].mxu0
        %v1153 = vadd.f32 %v982, %v1152
        %v1154 = vpop.f32.mrb[0].mxu0
        %1155 = vmatprep.mubr.bf16.mxu0 0
        %1156 = vmatmul.mubr.bf16.gmra.mrb[0].mxu0 %v1031
        %v1157 = vpop.f32.mrb[0].mxu0
        %v1158 = vadd.f32 %v982, %v1157
        %v1159 = vpop.f32.mrb[0].mxu0
        %v1160 = vpop.f32.mrb[0].mxu0
        %v1161 = vadd.f32 %v982, %v1160
        %v1162 = vpop.f32.mrb[0].mxu0
        %1163 = vmatprep.mubr.bf16.mxu0 0
        %1164 = vmatmul.mubr.bf16.gmra.mrb[0].mxu0 %v1034
        %v1165 = vpop.f32.mrb[0].mxu0
        %v1166 = vadd.f32 %v982, %v1165
        %v1167 = vpop.f32.mrb[0].mxu0
        %v1168 = vpop.f32.mrb[0].mxu0
        %v1169 = vadd.f32 %v982, %v1168
        %v1170 = vpop.f32.mrb[0].mxu0
        %1171 = vmatprep.mubr.bf16.mxu0 0
        %1172 = vmatmul.mubr.bf16.gmra.mrb[0].mxu0 %v1037
        %v1173 = vpop.f32.mrb[0].mxu0
        %v1174 = vadd.f32 %v982, %v1173
        %v1175 = vpop.f32.mrb[0].mxu0
        %v1176 = vpop.f32.mrb[0].mxu0
        %v1177 = vadd.f32 %v982, %v1176
        %v1178 = vpop.f32.mrb[0].mxu0
        %1179 = vmatprep.mubr.bf16.mxu0 0
        %1180 = vmatmul.mubr.bf16.gmra.mrb[0].mxu0 %v1040
        %v1181 = vpop.f32.mrb[0].mxu0
        %v1182 = vadd.f32 %v982, %v1181
        %v1183 = vpop.f32.mrb[0].mxu0
        %v1184 = vpop.f32.mrb[0].mxu0
        %v1185 = vadd.f32 %v982, %v1184
        %v1186 = vpop.f32.mrb[0].mxu0
        %1187 = vmatprep.mubr.bf16.mxu0 0
        %1188 = vmatmul.mubr.bf16.gmra.mrb[0].mxu0 %v1043
        %v1189 = vpop.f32.mrb[0].mxu0
        %v1190 = vadd.f32 %v982, %v1189
        %v1191 = vpop.f32.mrb[0].mxu0
        %v1192 = vpop.f32.mrb[0].mxu0
        %v1193 = vadd.f32 %v982, %v1192
        %v1194 = vpop.f32.mrb[0].mxu0
        %1195 = vmatprep.mubr.bf16.mxu0 0
        %1196 = vmatmul.mubr.bf16.gmra.mrb[0].mxu0 %v1046
        %v1197 = vpop.f32.mrb[0].mxu0
        %v1198 = vadd.f32 %v982, %v1197
        %v1199 = vpop.f32.mrb[0].mxu0
        %v1200 = vpop.f32.mrb[0].mxu0
        %v1201 = vadd.f32 %v982, %v1200
        %v1202 = vpop.f32.mrb[0].mxu0
        %1203 = vmatprep.mubr.bf16.mxu0 0
        %1204 = vmatmul.mubr.bf16.gmra.mrb[0].mxu0 %v1049
        %v1205 = vpop.f32.mrb[0].mxu0
        %v1206 = vadd.f32 %v982, %v1205
        %v1207 = vpop.f32.mrb[0].mxu0
        %v1208 = vpop.f32.mrb[0].mxu0
        %v1209 = vadd.f32 %v982, %v1208
        %v1210 = vpop.f32.mrb[0].mxu0
        %1211 = vdwg.mxu0
        %1212 = vst [vmem:[%s272] sm:$0xff] %v1086
        %1213 = vst [vmem:[%s272 + $0x8] sm:$0xff] %v1089
        %1214 = vst [vmem:[%s272 + $0x10] sm:$0xff] %v1094
        %1215 = vst [vmem:[%s272 + $0x18] sm:$0xff] %v1097
        %1216 = vst [vmem:[%s272 + $0x20] sm:$0xff] %v1102
        %1217 = vst [vmem:[%s272 + $0x28] sm:$0xff] %v1105
        %1218 = vst [vmem:[%s272 + $0x30] sm:$0xff] %v1110
        %1219 = vst [vmem:[%s272 + $0x38] sm:$0xff] %v1113
        %1220 = vst [vmem:[%s272 + $0x40] sm:$0xff] %v1118
        %1221 = vst [vmem:[%s272 + $0x48] sm:$0xff] %v1121
        %1222 = vst [vmem:[%s272 + $0x50] sm:$0xff] %v1126
        %1223 = vst [vmem:[%s272 + $0x58] sm:$0xff] %v1129
        %1224 = vst [vmem:[%s272 + $0x60] sm:$0xff] %v1134
        %1225 = vst [vmem:[%s272 + $0x68] sm:$0xff] %v1137
        %1226 = vst [vmem:[%s272 + $0x70] sm:$0xff] %v1142
        %1227 = vst [vmem:[%s272 + $0x78] sm:$0xff] %v1145
        %1228 = vst [vmem:[%s272 + $0x80] sm:$0xff] %v1150
        %1229 = vst [vmem:[%s272 + $0x88] sm:$0xff] %v1153
        %1230 = vst [vmem:[%s272 + $0x90] sm:$0xff] %v1158
        %1231 = vst [vmem:[%s272 + $0x98] sm:$0xff] %v1161
        %1232 = vst [vmem:[%s272 + $0xa0] sm:$0xff] %v1166
        %1233 = vst [vmem:[%s272 + $0xa8] sm:$0xff] %v1169
        %1234 = vst [vmem:[%s272 + $0xb0] sm:$0xff] %v1174
        %1235 = vst [vmem:[%s272 + $0xb8] sm:$0xff] %v1177
        %1236 = vst [vmem:[%s272 + $0xc0] sm:$0xff] %v1182
        %1237 = vst [vmem:[%s272 + $0xc8] sm:$0xff] %v1185
        %1238 = vst [vmem:[%s272 + $0xd0] sm:$0xff] %v1190
        %1239 = vst [vmem:[%s272 + $0xd8] sm:$0xff] %v1193
        %1240 = vst [vmem:[%s272 + $0xe0] sm:$0xff] %v1198
        %1241 = vst [vmem:[%s272 + $0xe8] sm:$0xff] %v1201
        %1242 = vst [vmem:[%s272 + $0xf0] sm:$0xff] %v1206
        %1243 = vst [vmem:[%s272 + $0xf8] sm:$0xff] %v1209
        %s1244 = sand.u32 %s181, 1
        %s1245 = scalar_lea.sflag [#allocation3], %s1244
        %s1246 = sand.u32 %s181, 1
        %s1247 = smul.addr %s1246, 256
        %s1248 = scalar_lea.vmem [#allocation2], %s1247
        // Predicated region
        $region49: #{tpu_custom_call.1} parent=47 // pred_check
          %p1249 = pneg %p191
        $region50: #{tpu_custom_call.1} parent=47 // pred_check_branch
          %1251 = sbr.rel (%p1249) target = $region52
        $region51: #{tpu_custom_call.1} parent=47 // pred_region
          %s1252 = smul.u32 32, %s21
          %s1254 = ssub.s32 4096, 4096
          %1255 = vsyncadd %s1245, %s1254
          %s1256 = smul.addr %s1252, 128
          %s1257 = scalar_lea.hbm %s7, %s1256
          %s1258 = sshll.u32 %s1248, 4
          %s1259 = int_to_ptr.vmem [resolvable:$true] %s1258
          %1264 = dma.vmem_to_hbm [thread:$0]  %s1259, 4096, %s1257, %s1245, 128, 128, 8
        $region52: #{tpu_custom_call.1} parent=47 // pred_fallthru
          _
      $region48: #{tpu_custom_call.1} parent=5 // pred_fallthru
        _
      %p1265 = scmp.le.s32.totalorder 2, %s16
      // Predicated region
      $region53: #{tpu_custom_call.1} parent=5 // pred_check
        %p1266 = pneg %p1265
      $region54: #{tpu_custom_call.1} parent=5 // pred_check_branch
        %1268 = sbr.rel (%p1266) target = $region56
      $region55: #{tpu_custom_call.1} parent=5 // pred_region
        %s1269 = ssub.s32 %s16, 2
        // Predicated region
        $region57: #{tpu_custom_call.1} parent=55 // pred_check
          %p1270 = pneg %p197
        $region58: #{tpu_custom_call.1} parent=55 // pred_check_branch
          %1272 = sbr.rel (%p1270) target = $region60
        $region59: #{tpu_custom_call.1} parent=55 // pred_region
          %s1273 = sand.u32 %s182, 1
          %s1274 = scalar_lea.sflag [#allocation3], %s1273
          %s1275 = sand.u32 %s182, 1
          %s1276 = smul.addr %s1275, 256
          %s1277 = scalar_lea.vmem [#allocation2], %s1276
          %1278 = dma.done %s1274, 4096
        $region60: #{tpu_custom_call.1} parent=55 // pred_fallthru
          _
      $region56: #{tpu_custom_call.1} parent=5 // pred_fallthru
        _
    $region6: #{tpu_custom_call.1} parent=1 // loop_footer
      %s20 = sadd.s32 1, %s16
    $region7: #{tpu_custom_call.1} parent=1 // loop_footer_branch
      %15 = sbr.rel target = $region3
    $region8: #{tpu_custom_call.1} parent=1 // loop_exit
      _
    %1279 = vsyncpa [#allocation3], 1
    %s1280 = scalar_lea.sflag [#allocation3], 1
    %1281 = vsyncpa %s1280, 1

</llo_original>
